<compile_context>
chip_gen: v7x
topology: tpu7x:2x2x1
jax: 0.10.0
libtpu: 0.0.40
codegen_flags: <defaults>
</compile_context>

<pallas_src>
import functools

import jax
import jax.numpy as jnp
import numpy as np
from jax.experimental import pallas as pl
from jax.experimental.pallas import tpu as pltpu


_LANE_CANDIDATES = (4096, 2048, 1024, 512, 256, 128)  # lane-dense first
_TILE_BYTES_TARGET = 4 << 20   # ~4 MiB blocks: amortize ~0.35 us/step overhead
_VMEM_LIMIT_BYTES = 32 << 20   # 2 specs x 2 buffers x 4 MiB = 16 MiB << 32 MiB;
                               # 32 MiB scoped is safe on v5e/v6e/v7x.


def _identity_kernel(x_ref, o_ref):
    # Whole-tile copy: the "hot path" of an identity forward.
    o_ref[...] = x_ref[...]


def _sublane_multiple(dtype) -> int:
    # Minimum sublane tile per element width (packed sub-32-bit dtypes).
    itemsize = jnp.dtype(dtype).itemsize
    return {4: 8, 2: 16, 1: 32}.get(itemsize, 8)


def _round_up(v: int, m: int) -> int:
    return ((v + m - 1) // m) * m


@functools.partial(jax.jit, static_argnums=(1, 2, 3), donate_argnums=0)
def _identity_forward_impl(x, rows, lanes, tile_rows):
    orig_shape = x.shape
    n = x.size
    flat = x.reshape(-1)

    pad = rows * lanes - n
    if pad:
        # Rare ragged path (n not a multiple of 128).  Under jit this still
        # costs extra HBM passes for the pad/slice.
        # TODO(synk): replace with an in-kernel masked tail store so ragged
        # sizes also run at a single read+write of HBM.
        flat = jnp.pad(flat, (0, pad))
    slab = flat.reshape(rows, lanes)

    out_slab = pl.pallas_call(
        _identity_kernel,
        out_shape=jax.ShapeDtypeStruct((rows, lanes), slab.dtype),
        grid_spec=pltpu.PrefetchScalarGridSpec(
            num_scalar_prefetch=0,
            grid=(pl.cdiv(rows, tile_rows),),
            in_specs=[pl.BlockSpec((tile_rows, lanes), lambda i: (i, 0))],
            out_specs=pl.BlockSpec((tile_rows, lanes), lambda i: (i, 0)),
        ),
        # In-place in HBM when paired with the donated jit input: no second
        # output buffer, no copy-on-output bookkeeping.
        input_output_aliases={0: 0},
        compiler_params=pltpu.CompilerParams(
            dimension_semantics=("parallel",),  # shard steps across v7x's 2 TCs
            vmem_limit_bytes=_VMEM_LIMIT_BYTES,
        ),
    )(slab)

    out_flat = out_slab.reshape(-1)
    if pad:
        out_flat = out_flat[:n]
    return out_flat.reshape(orig_shape)


def model_base_forward(x):
    """Identity forward of ModelBase, executed through a Pallas TPU kernel.

    Returns `x` unchanged (same shape, same dtype) after routing the data
    through VMEM via a tiled, jit-compiled, in-place pallas_call copy.
    NOTE: the input buffer is donated; do not reuse `x` after this call.
    """
    n = x.size
    if n == 0:
        return x  # empty input: nothing to copy, avoid a zero-size grid

    itemsize = jnp.dtype(x.dtype).itemsize
    sub = _sublane_multiple(x.dtype)

    # Wide, lane-dense last dim: pick the largest multiple of 128 that divides
    # n so no host-side padding / slicing is needed; only fall back to 128 +
    # pad when n is not a multiple of 128.
    lanes = next((c for c in _LANE_CANDIDATES if n % c == 0), 128)
    rows = -(-n // lanes)  # ceil

    # Tile sizing: ~4 MiB blocks, sublane-aligned (dtype-aware multiple).
    max_tile_rows = max(sub, (_TILE_BYTES_TARGET // (lanes * itemsize)) // sub * sub)

    if rows > max_tile_rows:
        tile_rows = max_tile_rows            # multi-step pipeline, masked tail block
    elif rows >= 2 * sub:
        # Force >=2 grid steps so both v7x TensorCores get a share of the copy.
        tile_rows = min(max_tile_rows, _round_up((rows + 1) // 2, sub))
    else:
        tile_rows = rows                     # tiny slab: one full-extent block

    return _identity_forward_impl(x, rows, lanes, tile_rows)


if __name__ == "__main__":
    key = jax.random.PRNGKey(0)
    # Small NCHW input consistent with a typical vision ModelBase subclass.
    x = jax.random.normal(key, (2, 4, 16, 16), dtype=jnp.float32)

    # Snapshot to host BEFORE the call: the input buffer is donated.
    x_host = jax.device_get(x)

    y = model_base_forward(x)
    y = jax.block_until_ready(y)

    # Identity semantics check.
    assert y.shape == x_host.shape and y.dtype == x_host.dtype
    assert np.allclose(jax.device_get(y), x_host), "identity forward mismatch"

    print("KERNEL_OK")
</pallas_src>

<mosaic_0001>
module attributes {stable_mosaic.version = 11 : i64} {
  func.func @_identity_kernel(%arg0: i32, %arg1: memref<1x2048xf32, #tpu.memory_space<vmem>>, %arg2: memref<1x2048xf32, #tpu.memory_space<vmem>>) attributes {dimension_semantics = [#tpu.dimension_semantics<parallel>], iteration_bounds = array<i64: 1>, scalar_prefetch = 0 : i64, scratch_operands = 0 : i64, tpu.core_type = #tpu.core_type<tc>, window_params = [{transform_indices = @transform_0, window_bounds = array<i64: 1, 2048>}, {transform_indices = @transform_1, window_bounds = array<i64: 1, 2048>}]} {
    %c0 = arith.constant 0 : index
    %c0_0 = arith.constant 0 : index
    %0 = vector.load %arg1[%c0, %c0_0] : memref<1x2048xf32, #tpu.memory_space<vmem>>, vector<1x2048xf32>
    %c0_1 = arith.constant 0 : index
    %c0_2 = arith.constant 0 : index
    %1 = vector.load %arg2[%c0_1, %c0_2] : memref<1x2048xf32, #tpu.memory_space<vmem>>, vector<1x2048xf32>
    tpu.vector_store %arg2[%c0_1, %c0_2], %0 {strides = array<i32>} : memref<1x2048xf32, #tpu.memory_space<vmem>>, vector<1x2048xf32>,
    return
  }
  func.func @transform_0(%arg0: i32) -> (i32, i32) {
    %c0_i32 = arith.constant 0 : i32
    %c0_i32_0 = arith.constant 0 : i32
    return %arg0, %c0_i32 : i32, i32
  }
  func.func @transform_1(%arg0: i32) -> (i32, i32) {
    %c0_i32 = arith.constant 0 : i32
    %c0_i32_0 = arith.constant 0 : i32
    return %arg0, %c0_i32 : i32, i32
  }
}

</mosaic_0001>

<llo_original>
// kernel: _identity_forward_impl.1
$region0: #{_identity_forward_impl.1}
  #allocation0 [shape = 'u32[]', space=smem, size = 0x4, offset = 0x4, fixed_abs, tag = 'smem constant byte address 0x4 - core index']
  #allocation1 [shape = 'u32[144,128]{1,0:T(1,128)}', space=vmem, size = 0x12000, scoped, tag = 'internal scratch']
  %s0 = inlined_call_operand.vmem [shape: f32[1,2048], index: 0, kind: input, shape index: {}, may-alias: {0,1}]
  %s1 = inlined_call_operand.vmem [shape: f32[1,2048], index: 1, kind: output, shape index: {}, may-alias: {0,1}]
  %s2 = sld [smem:[#allocation0]]
  $region14: #{_identity_forward_impl.1} parent=0
    _
  %s4 = ssub.s32 1, %s2
  %s5 = scalar_select 0, %s4, %s2
  // Predicated region
  $region2: #{_identity_forward_impl.1} parent=0 // pred_check
    _
  $region3: #{_identity_forward_impl.1} parent=0 // pred_check_branch
    %7 = sbr.rel (0) target = $region5
  $region4: #{_identity_forward_impl.1} parent=0 // pred_region
    _
  $region5: #{_identity_forward_impl.1} parent=0 // pred_fallthru
    _
  %v8 = vld [vmem:[%s0] sm:$0xff]
  %v9 = vld [vmem:[%s0 + $0x8] sm:$0xff]
  %10 = vst [vmem:[%s1] sm:$0xff] %v8
  %11 = vst [vmem:[%s1 + $0x8] sm:$0xff] %v9
  // Predicated region
  $region6: #{_identity_forward_impl.1} parent=0 // pred_check
    _
  $region7: #{_identity_forward_impl.1} parent=0 // pred_check_branch
    %13 = sbr.rel (0) target = $region9
  $region8: #{_identity_forward_impl.1} parent=0 // pred_region
    _
  $region9: #{_identity_forward_impl.1} parent=0 // pred_fallthru
    _
  // Predicated region
  $region10: #{_identity_forward_impl.1} parent=0 // pred_check
    _
  $region11: #{_identity_forward_impl.1} parent=0 // pred_check_branch
    %15 = sbr.rel (0) target = $region13
  $region12: #{_identity_forward_impl.1} parent=0 // pred_region
    _
  $region13: #{_identity_forward_impl.1} parent=0 // pred_fallthru
    _

</llo_original>
